<compile_context>
chip_gen: v5e
topology: v5e:2x2
jax: 0.10.0
libtpu: 0.0.40
codegen_flags: <defaults>
</compile_context>

<pallas_src>
import functools

import jax
import jax.numpy as jnp
from jax.experimental import pallas as pl
from jax.experimental.pallas import tpu as pltpu


def _mlp_kernel(w1_ref, b1_ref, w2_ref, b2_ref, x_ref, o_ref, *, hidden):
    # x_ref : (2, TBs, 128) VMEM  -- batch dense over (sublane, lane), feature on axis 0
    # w1_ref: (2*hidden,)  SMEM   -- fc1 weight, PyTorch (out,in) flattened row-major
    # b1_ref: (hidden,)    SMEM
    # w2_ref: (hidden,)    SMEM   -- fc2 weight
    # b2_ref: (1,)         SMEM
    # o_ref : (TBs, 128)   VMEM   -- dense, lane- and sublane-full output tile
    x0 = x_ref[0]                                    # (TBs, 128)
    x1 = x_ref[1]                                    # (TBs, 128)

    # Unrolled loop over hidden units: per unit, two scalar*vector FMAs + bias + ReLU,
    # then a scalar*vector accumulate into y.  All scalars come from SMEM/sregs, so no
    # broadcast materialization and no cross-sublane reduce is needed for fc2.
    y = None
    for o in range(hidden):
        h = jnp.maximum(x0 * w1_ref[2 * o] + x1 * w1_ref[2 * o + 1] + b1_ref[o], 0.0)
        y = h * w2_ref[o] if y is None else y + h * w2_ref[o]
    y = y + b2_ref[0]

    # sigmoid(y) == 0.5 * (tanh(y/2) + 1): one EUP op, keeps the VALU slot free.
    o_ref[...] = 0.5 * jnp.tanh(0.5 * y) + 0.5


def simple_nn_forward_feature_major(x_fm, w1, b1, w2, b2, *, block_rows=512):
    """Core entry point. x_fm is feature-major (2, B) f32 -> returns (B, 1) f32.

    Callers that can produce feature-major activations should use this directly;
    it performs no host-side transpose of x.
    """
    in_f, B = x_fm.shape
    hidden = w1.shape[0]
    out_f = w2.shape[0]
    assert in_f == 2 and out_f == 1, "kernel is specialized to Linear(2,H)+Linear(H,1)"
    assert block_rows % 8 == 0, "block_rows must be a multiple of 8 (sublane granule)"

    # Batch as dense rows of 128 lanes.  block_rows=512 -> 64K batch elems / grid step.
    R = pl.cdiv(B, 128)
    TBs = R if R <= block_rows else block_rows
    grid = (pl.cdiv(R, TBs),)

    # Free reshape when B % 128 == 0; otherwise one small pad (fused by XLA with
    # whatever produced x_fm).  No output-side slice copy: tail lanes of the last
    # row are simply never read back, and the padded tail is only used per-lane
    # (no batch-axis reduction inside the kernel), so garbage there is harmless.
    x_fm = x_fm.astype(jnp.float32)
    if B != R * 128:
        x_fm = jnp.pad(x_fm, ((0, 0), (0, R * 128 - B)))
    x3 = x_fm.reshape(in_f, R, 128)

    # Tiny parameter vectors live in SMEM and feed scalar operands to the VPU FMAs.
    w1_flat = w1.reshape(-1).astype(jnp.float32)      # (2*hidden,)
    b1_flat = b1.reshape(-1).astype(jnp.float32)      # (hidden,)
    w2_flat = w2.reshape(-1).astype(jnp.float32)      # (hidden,)
    b2_flat = b2.reshape(-1).astype(jnp.float32)      # (1,)

    smem = pl.BlockSpec(memory_space=pltpu.MemorySpace.SMEM)

    out2d = pl.pallas_call(
        functools.partial(_mlp_kernel, hidden=hidden),
        out_shape=jax.ShapeDtypeStruct((R, 128), jnp.float32),
        grid=grid,
        in_specs=[
            smem,                                                  # w1: SMEM resident
            smem,                                                  # b1
            smem,                                                  # w2
            smem,                                                  # b2
            pl.BlockSpec((in_f, TBs, 128), lambda i: (0, i, 0)),   # x: streamed, dense tiles
        ],
        out_specs=pl.BlockSpec((TBs, 128), lambda i: (i, 0)),      # dense unmasked stores
        compiler_params=pltpu.CompilerParams(
            # Split batch tiles across TensorCores (free 2x on v7x); single-core
            # chips (v5e/v6e) are unaffected.
            dimension_semantics=("parallel",),
            # Explicit scoped-VMEM budget: footprint is ~3 MiB at block_rows=512,
            # safely under v5e's 16 MiB default and v7x's 64 MiB physical per TC.
            vmem_limit_bytes=32 * 1024 * 1024,
        ),
    )(w1_flat, b1_flat, w2_flat, b2_flat, x3)

    # View-style plumbing back to PyTorch's (B, 1); (R*128,)[:B] is the only slice.
    return out2d.reshape(R * 128)[:B].reshape(B, 1)


def simple_nn_forward(x, w1, b1, w2, b2, *, block_rows=512):
    """PyTorch-layout entry: x (B, 2) f32, params in nn.Linear layout.

    Does exactly one (fused) transpose to feature-major; use
    simple_nn_forward_feature_major directly to avoid it entirely.
    """
    return simple_nn_forward_feature_major(x.T, w1, b1, w2, b2, block_rows=block_rows)


def init_params(key):
    # PyTorch nn.Linear default init: uniform(+/- 1/sqrt(fan_in)), weight shape (out, in).
    k1, k2, k3, k4 = jax.random.split(key, 4)
    bound1 = 1.0 / jnp.sqrt(2.0)
    bound2 = 1.0 / jnp.sqrt(10.0)
    w1 = jax.random.uniform(k1, (10, 2), jnp.float32, -bound1, bound1)
    b1 = jax.random.uniform(k2, (10,), jnp.float32, -bound1, bound1)
    w2 = jax.random.uniform(k3, (1, 10), jnp.float32, -bound2, bound2)
    b2 = jax.random.uniform(k4, (1,), jnp.float32, -bound2, bound2)
    return w1, b1, w2, b2


def reference_forward(x, w1, b1, w2, b2):
    h = jnp.maximum(x @ w1.T + b1, 0.0)
    y = h @ w2.T + b2
    return 1.0 / (1.0 + jnp.exp(-y))   # == torch.sigmoid in f32


if __name__ == "__main__":
    key = jax.random.PRNGKey(0)
    k_x, k_p = jax.random.split(key)
    w1, b1, w2, b2 = init_params(k_p)

    # Case 1: small batch, non-multiple of 128 -> exercises the masked tail lanes.
    x = jax.random.normal(k_x, (300, 2), dtype=jnp.float32)
    out = jax.block_until_ready(simple_nn_forward(x, w1, b1, w2, b2))
    ref = reference_forward(x, w1, b1, w2, b2)
    assert out.shape == (300, 1)
    assert jnp.allclose(out, ref, atol=1e-5, rtol=1e-5)

    # Case 2: multi-step grid (batch rows > block_rows) -> exercises the pipeline.
    x2 = jax.random.normal(k_x, (4096, 2), dtype=jnp.float32)
    out2 = jax.block_until_ready(simple_nn_forward(x2, w1, b1, w2, b2, block_rows=8))
    ref2 = reference_forward(x2, w1, b1, w2, b2)
    assert out2.shape == (4096, 1)
    assert jnp.allclose(out2, ref2, atol=1e-5, rtol=1e-5)

    print("KERNEL_OK")
</pallas_src>

<mosaic_0001>
module attributes {stable_mosaic.version = 11 : i64} {
  func.func @_mlp_kernel(%arg0: i32, %arg1: memref<20xf32, #tpu.memory_space<smem>>, %arg2: memref<10xf32, #tpu.memory_space<smem>>, %arg3: memref<10xf32, #tpu.memory_space<smem>>, %arg4: memref<1xf32, #tpu.memory_space<smem>>, %arg5: memref<2x3x128xf32, #tpu.memory_space<vmem>>, %arg6: memref<3x128xf32, #tpu.memory_space<vmem>>) attributes {dimension_semantics = [#tpu.dimension_semantics<parallel>], iteration_bounds = array<i64: 1>, scalar_prefetch = 0 : i64, scratch_operands = 0 : i64, tpu.core_type = #tpu.core_type<tc>, window_params = [{transform_indices = @transform_0, window_bounds = array<i64: 20>}, {transform_indices = @transform_1, window_bounds = array<i64: 10>}, {transform_indices = @transform_2, window_bounds = array<i64: 10>}, {transform_indices = @transform_3, window_bounds = array<i64: 1>}, {transform_indices = @transform_4, window_bounds = array<i64: 2, 3, 128>}, {transform_indices = @transform_5, window_bounds = array<i64: 3, 128>}]} {
    %c0 = arith.constant 0 : index
    %c0_0 = arith.constant 0 : index
    %c0_1 = arith.constant 0 : index
    %0 = vector.load %arg5[%c0, %c0_0, %c0_1] : memref<2x3x128xf32, #tpu.memory_space<vmem>>, vector<1x3x128xf32>
    %1 = vector.shape_cast %0 : vector<1x3x128xf32> to vector<3x128xf32>
    %c1 = arith.constant 1 : index
    %c0_2 = arith.constant 0 : index
    %c0_3 = arith.constant 0 : index
    %2 = vector.load %arg5[%c1, %c0_2, %c0_3] : memref<2x3x128xf32, #tpu.memory_space<vmem>>, vector<1x3x128xf32>
    %3 = vector.shape_cast %2 : vector<1x3x128xf32> to vector<3x128xf32>
    %c0_4 = arith.constant 0 : index
    %4 = memref.load %arg1[%c0_4] : memref<20xf32, #tpu.memory_space<smem>>
    %5 = vector.broadcast %4 : f32 to vector<3x128xf32>
    %6 = arith.mulf %1, %5 : vector<3x128xf32>
    %c1_5 = arith.constant 1 : index
    %7 = memref.load %arg1[%c1_5] : memref<20xf32, #tpu.memory_space<smem>>
    %8 = vector.broadcast %7 : f32 to vector<3x128xf32>
    %9 = arith.mulf %3, %8 : vector<3x128xf32>
    %10 = arith.addf %6, %9 : vector<3x128xf32>
    %c0_6 = arith.constant 0 : index
    %11 = memref.load %arg2[%c0_6] : memref<10xf32, #tpu.memory_space<smem>>
    %12 = vector.broadcast %11 : f32 to vector<3x128xf32>
    %13 = arith.addf %10, %12 : vector<3x128xf32>
    %cst = arith.constant 0.000000e+00 : f32
    %14 = vector.broadcast %cst : f32 to vector<3x128xf32>
    %15 = arith.maximumf %13, %14 : vector<3x128xf32>
    %c0_7 = arith.constant 0 : index
    %16 = memref.load %arg3[%c0_7] : memref<10xf32, #tpu.memory_space<smem>>
    %17 = vector.broadcast %16 : f32 to vector<3x128xf32>
    %18 = arith.mulf %15, %17 : vector<3x128xf32>
    %c2 = arith.constant 2 : index
    %19 = memref.load %arg1[%c2] : memref<20xf32, #tpu.memory_space<smem>>
    %20 = vector.broadcast %19 : f32 to vector<3x128xf32>
    %21 = arith.mulf %1, %20 : vector<3x128xf32>
    %c3 = arith.constant 3 : index
    %22 = memref.load %arg1[%c3] : memref<20xf32, #tpu.memory_space<smem>>
    %23 = vector.broadcast %22 : f32 to vector<3x128xf32>
    %24 = arith.mulf %3, %23 : vector<3x128xf32>
    %25 = arith.addf %21, %24 : vector<3x128xf32>
    %c1_8 = arith.constant 1 : index
    %26 = memref.load %arg2[%c1_8] : memref<10xf32, #tpu.memory_space<smem>>
    %27 = vector.broadcast %26 : f32 to vector<3x128xf32>
    %28 = arith.addf %25, %27 : vector<3x128xf32>
    %cst_9 = arith.constant 0.000000e+00 : f32
    %29 = vector.broadcast %cst_9 : f32 to vector<3x128xf32>
    %30 = arith.maximumf %28, %29 : vector<3x128xf32>
    %c1_10 = arith.constant 1 : index
    %31 = memref.load %arg3[%c1_10] : memref<10xf32, #tpu.memory_space<smem>>
    %32 = vector.broadcast %31 : f32 to vector<3x128xf32>
    %33 = arith.mulf %30, %32 : vector<3x128xf32>
    %34 = arith.addf %18, %33 : vector<3x128xf32>
    %c4 = arith.constant 4 : index
    %35 = memref.load %arg1[%c4] : memref<20xf32, #tpu.memory_space<smem>>
    %36 = vector.broadcast %35 : f32 to vector<3x128xf32>
    %37 = arith.mulf %1, %36 : vector<3x128xf32>
    %c5 = arith.constant 5 : index
    %38 = memref.load %arg1[%c5] : memref<20xf32, #tpu.memory_space<smem>>
    %39 = vector.broadcast %38 : f32 to vector<3x128xf32>
    %40 = arith.mulf %3, %39 : vector<3x128xf32>
    %41 = arith.addf %37, %40 : vector<3x128xf32>
    %c2_11 = arith.constant 2 : index
    %42 = memref.load %arg2[%c2_11] : memref<10xf32, #tpu.memory_space<smem>>
    %43 = vector.broadcast %42 : f32 to vector<3x128xf32>
    %44 = arith.addf %41, %43 : vector<3x128xf32>
    %cst_12 = arith.constant 0.000000e+00 : f32
    %45 = vector.broadcast %cst_12 : f32 to vector<3x128xf32>
    %46 = arith.maximumf %44, %45 : vector<3x128xf32>
    %c2_13 = arith.constant 2 : index
    %47 = memref.load %arg3[%c2_13] : memref<10xf32, #tpu.memory_space<smem>>
    %48 = vector.broadcast %47 : f32 to vector<3x128xf32>
    %49 = arith.mulf %46, %48 : vector<3x128xf32>
    %50 = arith.addf %34, %49 : vector<3x128xf32>
    %c6 = arith.constant 6 : index
    %51 = memref.load %arg1[%c6] : memref<20xf32, #tpu.memory_space<smem>>
    %52 = vector.broadcast %51 : f32 to vector<3x128xf32>
    %53 = arith.mulf %1, %52 : vector<3x128xf32>
    %c7 = arith.constant 7 : index
    %54 = memref.load %arg1[%c7] : memref<20xf32, #tpu.memory_space<smem>>
    %55 = vector.broadcast %54 : f32 to vector<3x128xf32>
    %56 = arith.mulf %3, %55 : vector<3x128xf32>
    %57 = arith.addf %53, %56 : vector<3x128xf32>
    %c3_14 = arith.constant 3 : index
    %58 = memref.load %arg2[%c3_14] : memref<10xf32, #tpu.memory_space<smem>>
    %59 = vector.broadcast %58 : f32 to vector<3x128xf32>
    %60 = arith.addf %57, %59 : vector<3x128xf32>
    %cst_15 = arith.constant 0.000000e+00 : f32
    %61 = vector.broadcast %cst_15 : f32 to vector<3x128xf32>
    %62 = arith.maximumf %60, %61 : vector<3x128xf32>
    %c3_16 = arith.constant 3 : index
    %63 = memref.load %arg3[%c3_16] : memref<10xf32, #tpu.memory_space<smem>>
    %64 = vector.broadcast %63 : f32 to vector<3x128xf32>
    %65 = arith.mulf %62, %64 : vector<3x128xf32>
    %66 = arith.addf %50, %65 : vector<3x128xf32>
    %c8 = arith.constant 8 : index
    %67 = memref.load %arg1[%c8] : memref<20xf32, #tpu.memory_space<smem>>
    %68 = vector.broadcast %67 : f32 to vector<3x128xf32>
    %69 = arith.mulf %1, %68 : vector<3x128xf32>
    %c9 = arith.constant 9 : index
    %70 = memref.load %arg1[%c9] : memref<20xf32, #tpu.memory_space<smem>>
    %71 = vector.broadcast %70 : f32 to vector<3x128xf32>
    %72 = arith.mulf %3, %71 : vector<3x128xf32>
    %73 = arith.addf %69, %72 : vector<3x128xf32>
    %c4_17 = arith.constant 4 : index
    %74 = memref.load %arg2[%c4_17] : memref<10xf32, #tpu.memory_space<smem>>
    %75 = vector.broadcast %74 : f32 to vector<3x128xf32>
    %76 = arith.addf %73, %75 : vector<3x128xf32>
    %cst_18 = arith.constant 0.000000e+00 : f32
    %77 = vector.broadcast %cst_18 : f32 to vector<3x128xf32>
    %78 = arith.maximumf %76, %77 : vector<3x128xf32>
    %c4_19 = arith.constant 4 : index
    %79 = memref.load %arg3[%c4_19] : memref<10xf32, #tpu.memory_space<smem>>
    %80 = vector.broadcast %79 : f32 to vector<3x128xf32>
    %81 = arith.mulf %78, %80 : vector<3x128xf32>
    %82 = arith.addf %66, %81 : vector<3x128xf32>
    %c10 = arith.constant 10 : index
    %83 = memref.load %arg1[%c10] : memref<20xf32, #tpu.memory_space<smem>>
    %84 = vector.broadcast %83 : f32 to vector<3x128xf32>
    %85 = arith.mulf %1, %84 : vector<3x128xf32>
    %c11 = arith.constant 11 : index
    %86 = memref.load %arg1[%c11] : memref<20xf32, #tpu.memory_space<smem>>
    %87 = vector.broadcast %86 : f32 to vector<3x128xf32>
    %88 = arith.mulf %3, %87 : vector<3x128xf32>
    %89 = arith.addf %85, %88 : vector<3x128xf32>
    %c5_20 = arith.constant 5 : index
    %90 = memref.load %arg2[%c5_20] : memref<10xf32, #tpu.memory_space<smem>>
    %91 = vector.broadcast %90 : f32 to vector<3x128xf32>
    %92 = arith.addf %89, %91 : vector<3x128xf32>
    %cst_21 = arith.constant 0.000000e+00 : f32
    %93 = vector.broadcast %cst_21 : f32 to vector<3x128xf32>
    %94 = arith.maximumf %92, %93 : vector<3x128xf32>
    %c5_22 = arith.constant 5 : index
    %95 = memref.load %arg3[%c5_22] : memref<10xf32, #tpu.memory_space<smem>>
    %96 = vector.broadcast %95 : f32 to vector<3x128xf32>
    %97 = arith.mulf %94, %96 : vector<3x128xf32>
    %98 = arith.addf %82, %97 : vector<3x128xf32>
    %c12 = arith.constant 12 : index
    %99 = memref.load %arg1[%c12] : memref<20xf32, #tpu.memory_space<smem>>
    %100 = vector.broadcast %99 : f32 to vector<3x128xf32>
    %101 = arith.mulf %1, %100 : vector<3x128xf32>
    %c13 = arith.constant 13 : index
    %102 = memref.load %arg1[%c13] : memref<20xf32, #tpu.memory_space<smem>>
    %103 = vector.broadcast %102 : f32 to vector<3x128xf32>
    %104 = arith.mulf %3, %103 : vector<3x128xf32>
    %105 = arith.addf %101, %104 : vector<3x128xf32>
    %c6_23 = arith.constant 6 : index
    %106 = memref.load %arg2[%c6_23] : memref<10xf32, #tpu.memory_space<smem>>
    %107 = vector.broadcast %106 : f32 to vector<3x128xf32>
    %108 = arith.addf %105, %107 : vector<3x128xf32>
    %cst_24 = arith.constant 0.000000e+00 : f32
    %109 = vector.broadcast %cst_24 : f32 to vector<3x128xf32>
    %110 = arith.maximumf %108, %109 : vector<3x128xf32>
    %c6_25 = arith.constant 6 : index
    %111 = memref.load %arg3[%c6_25] : memref<10xf32, #tpu.memory_space<smem>>
    %112 = vector.broadcast %111 : f32 to vector<3x128xf32>
    %113 = arith.mulf %110, %112 : vector<3x128xf32>
    %114 = arith.addf %98, %113 : vector<3x128xf32>
    %c14 = arith.constant 14 : index
    %115 = memref.load %arg1[%c14] : memref<20xf32, #tpu.memory_space<smem>>
    %116 = vector.broadcast %115 : f32 to vector<3x128xf32>
    %117 = arith.mulf %1, %116 : vector<3x128xf32>
    %c15 = arith.constant 15 : index
    %118 = memref.load %arg1[%c15] : memref<20xf32, #tpu.memory_space<smem>>
    %119 = vector.broadcast %118 : f32 to vector<3x128xf32>
    %120 = arith.mulf %3, %119 : vector<3x128xf32>
    %121 = arith.addf %117, %120 : vector<3x128xf32>
    %c7_26 = arith.constant 7 : index
    %122 = memref.load %arg2[%c7_26] : memref<10xf32, #tpu.memory_space<smem>>
    %123 = vector.broadcast %122 : f32 to vector<3x128xf32>
    %124 = arith.addf %121, %123 : vector<3x128xf32>
    %cst_27 = arith.constant 0.000000e+00 : f32
    %125 = vector.broadcast %cst_27 : f32 to vector<3x128xf32>
    %126 = arith.maximumf %124, %125 : vector<3x128xf32>
    %c7_28 = arith.constant 7 : index
    %127 = memref.load %arg3[%c7_28] : memref<10xf32, #tpu.memory_space<smem>>
    %128 = vector.broadcast %127 : f32 to vector<3x128xf32>
    %129 = arith.mulf %126, %128 : vector<3x128xf32>
    %130 = arith.addf %114, %129 : vector<3x128xf32>
    %c16 = arith.constant 16 : index
    %131 = memref.load %arg1[%c16] : memref<20xf32, #tpu.memory_space<smem>>
    %132 = vector.broadcast %131 : f32 to vector<3x128xf32>
    %133 = arith.mulf %1, %132 : vector<3x128xf32>
    %c17 = arith.constant 17 : index
    %134 = memref.load %arg1[%c17] : memref<20xf32, #tpu.memory_space<smem>>
    %135 = vector.broadcast %134 : f32 to vector<3x128xf32>
    %136 = arith.mulf %3, %135 : vector<3x128xf32>
    %137 = arith.addf %133, %136 : vector<3x128xf32>
    %c8_29 = arith.constant 8 : index
    %138 = memref.load %arg2[%c8_29] : memref<10xf32, #tpu.memory_space<smem>>
    %139 = vector.broadcast %138 : f32 to vector<3x128xf32>
    %140 = arith.addf %137, %139 : vector<3x128xf32>
    %cst_30 = arith.constant 0.000000e+00 : f32
    %141 = vector.broadcast %cst_30 : f32 to vector<3x128xf32>
    %142 = arith.maximumf %140, %141 : vector<3x128xf32>
    %c8_31 = arith.constant 8 : index
    %143 = memref.load %arg3[%c8_31] : memref<10xf32, #tpu.memory_space<smem>>
    %144 = vector.broadcast %143 : f32 to vector<3x128xf32>
    %145 = arith.mulf %142, %144 : vector<3x128xf32>
    %146 = arith.addf %130, %145 : vector<3x128xf32>
    %c18 = arith.constant 18 : index
    %147 = memref.load %arg1[%c18] : memref<20xf32, #tpu.memory_space<smem>>
    %148 = vector.broadcast %147 : f32 to vector<3x128xf32>
    %149 = arith.mulf %1, %148 : vector<3x128xf32>
    %c19 = arith.constant 19 : index
    %150 = memref.load %arg1[%c19] : memref<20xf32, #tpu.memory_space<smem>>
    %151 = vector.broadcast %150 : f32 to vector<3x128xf32>
    %152 = arith.mulf %3, %151 : vector<3x128xf32>
    %153 = arith.addf %149, %152 : vector<3x128xf32>
    %c9_32 = arith.constant 9 : index
    %154 = memref.load %arg2[%c9_32] : memref<10xf32, #tpu.memory_space<smem>>
    %155 = vector.broadcast %154 : f32 to vector<3x128xf32>
    %156 = arith.addf %153, %155 : vector<3x128xf32>
    %cst_33 = arith.constant 0.000000e+00 : f32
    %157 = vector.broadcast %cst_33 : f32 to vector<3x128xf32>
    %158 = arith.maximumf %156, %157 : vector<3x128xf32>
    %c9_34 = arith.constant 9 : index
    %159 = memref.load %arg3[%c9_34] : memref<10xf32, #tpu.memory_space<smem>>
    %160 = vector.broadcast %159 : f32 to vector<3x128xf32>
    %161 = arith.mulf %158, %160 : vector<3x128xf32>
    %162 = arith.addf %146, %161 : vector<3x128xf32>
    %c0_35 = arith.constant 0 : index
    %163 = memref.load %arg4[%c0_35] : memref<1xf32, #tpu.memory_space<smem>>
    %164 = vector.broadcast %163 : f32 to vector<3x128xf32>
    %165 = arith.addf %162, %164 : vector<3x128xf32>
    %cst_36 = arith.constant 5.000000e-01 : f32
    %166 = vector.broadcast %cst_36 : f32 to vector<3x128xf32>
    %167 = arith.mulf %166, %165 : vector<3x128xf32>
    %168 = math.tanh %167 : vector<3x128xf32>
    %cst_37 = arith.constant 5.000000e-01 : f32
    %169 = vector.broadcast %cst_37 : f32 to vector<3x128xf32>
    %170 = arith.mulf %169, %168 : vector<3x128xf32>
    %cst_38 = arith.constant 5.000000e-01 : f32
    %171 = vector.broadcast %cst_38 : f32 to vector<3x128xf32>
    %172 = arith.addf %170, %171 : vector<3x128xf32>
    %c0_39 = arith.constant 0 : index
    %c0_40 = arith.constant 0 : index
    %173 = vector.load %arg6[%c0_39, %c0_40] : memref<3x128xf32, #tpu.memory_space<vmem>>, vector<3x128xf32>
    tpu.vector_store %arg6[%c0_39, %c0_40], %172 {strides = array<i32>} : memref<3x128xf32, #tpu.memory_space<vmem>>, vector<3x128xf32>,
    return
  }
  func.func @transform_0(%arg0: i32) -> i32 {
    %c0_i32 = arith.constant 0 : i32
    %c0_i32_0 = arith.constant 0 : i32
    return %c0_i32 : i32
  }
  func.func @transform_1(%arg0: i32) -> i32 {
    %c0_i32 = arith.constant 0 : i32
    %c0_i32_0 = arith.constant 0 : i32
    return %c0_i32 : i32
  }
  func.func @transform_2(%arg0: i32) -> i32 {
    %c0_i32 = arith.constant 0 : i32
    %c0_i32_0 = arith.constant 0 : i32
    return %c0_i32 : i32
  }
  func.func @transform_3(%arg0: i32) -> i32 {
    %c0_i32 = arith.constant 0 : i32
    %c0_i32_0 = arith.constant 0 : i32
    return %c0_i32 : i32
  }
  func.func @transform_4(%arg0: i32) -> (i32, i32, i32) {
    %c0_i32 = arith.constant 0 : i32
    %c0_i32_0 = arith.constant 0 : i32
    %c0_i32_1 = arith.constant 0 : i32
    return %c0_i32, %arg0, %c0_i32_0 : i32, i32, i32
  }
  func.func @transform_5(%arg0: i32) -> (i32, i32) {
    %c0_i32 = arith.constant 0 : i32
    %c0_i32_0 = arith.constant 0 : i32
    return %arg0, %c0_i32 : i32, i32
  }
}

</mosaic_0001>

<llo_original>
// kernel: tpu_custom_call.1
$region0: #{tpu_custom_call.1}
  #allocation0 [shape = 'u32[]', space=smem, size = 0x4, offset = 0x4, fixed_abs, tag = 'smem constant byte address 0x4 - core index']
  #allocation1 [shape = 'u32[72,128]{1,0:T(1,128)}', space=vmem, size = 0x9000, scoped, tag = 'internal scratch']
  #allocation2 [shape = 'f32[1]{0:T(128)S(6)}', space=smem, size = 0x200, scoped, tag = 'scoped memory for tpu_custom_call.1']
  %s0 = inlined_call_operand.vmem [shape: f32[20], index: 0, kind: input, shape index: {}]
  %s1 = inlined_call_operand.vmem [shape: f32[10], index: 1, kind: input, shape index: {}]
  %s2 = inlined_call_operand.vmem [shape: f32[10], index: 2, kind: input, shape index: {}]
  %s3 = inlined_call_operand.<no memory space> [shape: f32[1], index: 3, kind: input, shape index: {}]
  %s4 = inlined_call_operand.vmem [shape: f32[2,3,128], index: 4, kind: input, shape index: {}]
  %s5 = inlined_call_operand.hbm [shape: f32[3,128], index: 5, kind: output, shape index: {}]
  %s6 = sld [smem:[#allocation0]]
  $region42: #{tpu_custom_call.1} parent=0
    _
  %s8 = ssub.s32 1, %s6
  %s9 = scalar_select 0, %s8, %s6
  %10 = sst [smem:[#allocation2]] %s3
  $region1: #{tpu_custom_call.1} parent=0
    #allocation3 [shape = 'u8[512]{0}', space=smem, size = 0x200, scoped, tag = 'input window, operand 0, single buffered']
    #allocation4 [shape = 's32[1]{0}', space=sflag, size = 0x4, scoped, tag = 'scoped memory for tpu_custom_call.1']
    #allocation5 [shape = 's32[1]{0}', space=sflag, size = 0x4, scoped, tag = 'scoped memory for tpu_custom_call.1']
    #allocation6 [shape = 'u8[512]{0}', space=smem, size = 0x200, scoped, tag = 'input window, operand 1, single buffered']
    #allocation7 [shape = 's32[1]{0}', space=sflag, size = 0x4, scoped, tag = 'scoped memory for tpu_custom_call.1']
    #allocation8 [shape = 'u8[512]{0}', space=smem, size = 0x200, scoped, tag = 'input window, operand 2, single buffered']
    #allocation9 [shape = 'u8[2048]{0}', space=vmem, size = 0x800, scoped, tag = 'output window, operand 0, single buffered']
    %11 = vsyncpa [#allocation5], 0
    %12 = vsyncpa [#allocation7], 0
    %13 = vsyncpa [#allocation4], 0
    // Predicated region
    $region2: #{tpu_custom_call.1} parent=1 // pred_check
      _
    $region3: #{tpu_custom_call.1} parent=1 // pred_check_branch
      %15 = sbr.rel (0) target = $region5
    $region4: #{tpu_custom_call.1} parent=1 // pred_region
      %17 = vsyncadd [#allocation5], 0
      %s19 = sshll.u32 %s0, 4
      %s20 = int_to_ptr.vmem [resolvable:$true] %s19
      %22 = dma.vmem_to_smem %s20, 16, [#allocation3], [#allocation5]
    $region5: #{tpu_custom_call.1} parent=1 // pred_fallthru
      _
    // Predicated region
    $region6: #{tpu_custom_call.1} parent=1 // pred_check
      _
    $region7: #{tpu_custom_call.1} parent=1 // pred_check_branch
      %24 = sbr.rel (0) target = $region9
    $region8: #{tpu_custom_call.1} parent=1 // pred_region
      %26 = vsyncadd [#allocation7], 0
      %s28 = sshll.u32 %s1, 4
      %s29 = int_to_ptr.vmem [resolvable:$true] %s28
      %31 = dma.vmem_to_smem %s29, 16, [#allocation6], [#allocation7]
    $region9: #{tpu_custom_call.1} parent=1 // pred_fallthru
      _
    // Predicated region
    $region10: #{tpu_custom_call.1} parent=1 // pred_check
      _
    $region11: #{tpu_custom_call.1} parent=1 // pred_check_branch
      %33 = sbr.rel (0) target = $region13
    $region12: #{tpu_custom_call.1} parent=1 // pred_region
      %35 = vsyncadd [#allocation7], 0
      %s37 = sshll.u32 %s2, 4
      %s38 = int_to_ptr.vmem [resolvable:$true] %s37
      %40 = dma.vmem_to_smem %s38, 16, [#allocation8], [#allocation7]
    $region13: #{tpu_custom_call.1} parent=1 // pred_fallthru
      _
    // Predicated region
    $region14: #{tpu_custom_call.1} parent=1 // pred_check
      _
    $region15: #{tpu_custom_call.1} parent=1 // pred_check_branch
      %42 = sbr.rel (0) target = $region17
    $region16: #{tpu_custom_call.1} parent=1 // pred_region
      _
    $region17: #{tpu_custom_call.1} parent=1 // pred_fallthru
      _
    // Predicated region
    $region18: #{tpu_custom_call.1} parent=1 // pred_check
      _
    $region19: #{tpu_custom_call.1} parent=1 // pred_check_branch
      %44 = sbr.rel (0) target = $region21
    $region20: #{tpu_custom_call.1} parent=1 // pred_region
      _
    $region21: #{tpu_custom_call.1} parent=1 // pred_fallthru
      _
    // Predicated region
    $region22: #{tpu_custom_call.1} parent=1 // pred_check
      _
    $region23: #{tpu_custom_call.1} parent=1 // pred_check_branch
      %46 = sbr.rel (0) target = $region25
    $region24: #{tpu_custom_call.1} parent=1 // pred_region
      %48 = dma.done [#allocation5], 16
    $region25: #{tpu_custom_call.1} parent=1 // pred_fallthru
      _
    // Predicated region
    $region26: #{tpu_custom_call.1} parent=1 // pred_check
      _
    $region27: #{tpu_custom_call.1} parent=1 // pred_check_branch
      %50 = sbr.rel (0) target = $region29
    $region28: #{tpu_custom_call.1} parent=1 // pred_region
      %52 = dma.done [#allocation7], 16
    $region29: #{tpu_custom_call.1} parent=1 // pred_fallthru
      _
    // Predicated region
    $region30: #{tpu_custom_call.1} parent=1 // pred_check
      _
    $region31: #{tpu_custom_call.1} parent=1 // pred_check_branch
      %54 = sbr.rel (0) target = $region33
    $region32: #{tpu_custom_call.1} parent=1 // pred_region
      %56 = dma.done [#allocation7], 16
    $region33: #{tpu_custom_call.1} parent=1 // pred_fallthru
      _
    %57 = sfence
    %v58 = vld [vmem:[%s4] sm:$0x7]
    %s59 = scalar_lea.vmem %s4, 4
    %v60 = vld [vmem:[%s59] sm:$0x7]
    %s61 = sld [smem:[#allocation3]]
    %v62 = vstv %s61
    %v63 = vmul.f32 %v58, %v62
    %s64 = sld [smem:[#allocation3 + $0x1]]
    %v65 = vstv %s64
    %v66 = vmul.f32 %v60, %v65
    %v67 = vadd.f32 %v63, %v66
    %s68 = sld [smem:[#allocation6]]
    %v69 = vstv %s68
    %v70 = vadd.f32 %v67, %v69
    %v71 = vmax.f32 %v70, 0.0
    %s72 = sld [smem:[#allocation8]]
    %v73 = vstv %s72
    %v74 = vmul.f32 %v71, %v73
    %s75 = sld [smem:[#allocation3 + $0x2]]
    %v76 = vstv %s75
    %v77 = vmul.f32 %v58, %v76
    %s78 = sld [smem:[#allocation3 + $0x3]]
    %v79 = vstv %s78
    %v80 = vmul.f32 %v60, %v79
    %v81 = vadd.f32 %v77, %v80
    %s82 = sld [smem:[#allocation6 + $0x1]]
    %v83 = vstv %s82
    %v84 = vadd.f32 %v81, %v83
    %v85 = vmax.f32 %v84, 0.0
    %s86 = sld [smem:[#allocation8 + $0x1]]
    %v87 = vstv %s86
    %v88 = vmul.f32 %v85, %v87
    %v89 = vadd.f32 %v74, %v88
    %s90 = sld [smem:[#allocation3 + $0x4]]
    %v91 = vstv %s90
    %v92 = vmul.f32 %v58, %v91
    %s93 = sld [smem:[#allocation3 + $0x5]]
    %v94 = vstv %s93
    %v95 = vmul.f32 %v60, %v94
    %v96 = vadd.f32 %v92, %v95
    %s97 = sld [smem:[#allocation6 + $0x2]]
    %v98 = vstv %s97
    %v99 = vadd.f32 %v96, %v98
    %v100 = vmax.f32 %v99, 0.0
    %s101 = sld [smem:[#allocation8 + $0x2]]
    %v102 = vstv %s101
    %v103 = vmul.f32 %v100, %v102
    %v104 = vadd.f32 %v89, %v103
    %s105 = sld [smem:[#allocation3 + $0x6]]
    %v106 = vstv %s105
    %v107 = vmul.f32 %v58, %v106
    %s108 = sld [smem:[#allocation3 + $0x7]]
    %v109 = vstv %s108
    %v110 = vmul.f32 %v60, %v109
    %v111 = vadd.f32 %v107, %v110
    %s112 = sld [smem:[#allocation6 + $0x3]]
    %v113 = vstv %s112
    %v114 = vadd.f32 %v111, %v113
    %v115 = vmax.f32 %v114, 0.0
    %s116 = sld [smem:[#allocation8 + $0x3]]
    %v117 = vstv %s116
    %v118 = vmul.f32 %v115, %v117
    %v119 = vadd.f32 %v104, %v118
    %s120 = sld [smem:[#allocation3 + $0x8]]
    %v121 = vstv %s120
    %v122 = vmul.f32 %v58, %v121
    %s123 = sld [smem:[#allocation3 + $0x9]]
    %v124 = vstv %s123
    %v125 = vmul.f32 %v60, %v124
    %v126 = vadd.f32 %v122, %v125
    %s127 = sld [smem:[#allocation6 + $0x4]]
    %v128 = vstv %s127
    %v129 = vadd.f32 %v126, %v128
    %v130 = vmax.f32 %v129, 0.0
    %s131 = sld [smem:[#allocation8 + $0x4]]
    %v132 = vstv %s131
    %v133 = vmul.f32 %v130, %v132
    %v134 = vadd.f32 %v119, %v133
    %s135 = sld [smem:[#allocation3 + $0xa]]
    %v136 = vstv %s135
    %v137 = vmul.f32 %v58, %v136
    %s138 = sld [smem:[#allocation3 + $0xb]]
    %v139 = vstv %s138
    %v140 = vmul.f32 %v60, %v139
    %v141 = vadd.f32 %v137, %v140
    %s142 = sld [smem:[#allocation6 + $0x5]]
    %v143 = vstv %s142
    %v144 = vadd.f32 %v141, %v143
    %v145 = vmax.f32 %v144, 0.0
    %s146 = sld [smem:[#allocation8 + $0x5]]
    %v147 = vstv %s146
    %v148 = vmul.f32 %v145, %v147
    %v149 = vadd.f32 %v134, %v148
    %s150 = sld [smem:[#allocation3 + $0xc]]
    %v151 = vstv %s150
    %v152 = vmul.f32 %v58, %v151
    %s153 = sld [smem:[#allocation3 + $0xd]]
    %v154 = vstv %s153
    %v155 = vmul.f32 %v60, %v154
    %v156 = vadd.f32 %v152, %v155
    %s157 = sld [smem:[#allocation6 + $0x6]]
    %v158 = vstv %s157
    %v159 = vadd.f32 %v156, %v158
    %v160 = vmax.f32 %v159, 0.0
    %s161 = sld [smem:[#allocation8 + $0x6]]
    %v162 = vstv %s161
    %v163 = vmul.f32 %v160, %v162
    %v164 = vadd.f32 %v149, %v163
    %s165 = sld [smem:[#allocation3 + $0xe]]
    %v166 = vstv %s165
    %v167 = vmul.f32 %v58, %v166
    %s168 = sld [smem:[#allocation3 + $0xf]]
    %v169 = vstv %s168
    %v170 = vmul.f32 %v60, %v169
    %v171 = vadd.f32 %v167, %v170
    %s172 = sld [smem:[#allocation6 + $0x7]]
    %v173 = vstv %s172
    %v174 = vadd.f32 %v171, %v173
    %v175 = vmax.f32 %v174, 0.0
    %s176 = sld [smem:[#allocation8 + $0x7]]
    %v177 = vstv %s176
    %v178 = vmul.f32 %v175, %v177
    %v179 = vadd.f32 %v164, %v178
    %s180 = sld [smem:[#allocation3 + $0x10]]
    %v181 = vstv %s180
    %v182 = vmul.f32 %v58, %v181
    %s183 = sld [smem:[#allocation3 + $0x11]]
    %v184 = vstv %s183
    %v185 = vmul.f32 %v60, %v184
    %v186 = vadd.f32 %v182, %v185
    %s187 = sld [smem:[#allocation6 + $0x8]]
    %v188 = vstv %s187
    %v189 = vadd.f32 %v186, %v188
    %v190 = vmax.f32 %v189, 0.0
    %s191 = sld [smem:[#allocation8 + $0x8]]
    %v192 = vstv %s191
    %v193 = vmul.f32 %v190, %v192
    %v194 = vadd.f32 %v179, %v193
    %s195 = sld [smem:[#allocation3 + $0x12]]
    %v196 = vstv %s195
    %v197 = vmul.f32 %v58, %v196
    %s198 = sld [smem:[#allocation3 + $0x13]]
    %v199 = vstv %s198
    %v200 = vmul.f32 %v60, %v199
    %v201 = vadd.f32 %v197, %v200
    %s202 = sld [smem:[#allocation6 + $0x9]]
    %v203 = vstv %s202
    %v204 = vadd.f32 %v201, %v203
    %v205 = vmax.f32 %v204, 0.0
    %s206 = sld [smem:[#allocation8 + $0x9]]
    %v207 = vstv %s206
    %v208 = vmul.f32 %v205, %v207
    %v209 = vadd.f32 %v194, %v208
    %s210 = sld [smem:[#allocation2]]
    %v211 = vstv %s210
    %v212 = vadd.f32 %v209, %v211
    %v213 = vmul.f32 %v212, 0.5
    %v214 = vtanh.pop %v213
    %v215 = vmul.f32 %v214, 0.5
    %v216 = vadd.f32 %v215, 0.5
    %217 = vst [vmem:[#allocation9] sm:$0x7] %v216
    // Predicated region
    $region34: #{tpu_custom_call.1} parent=1 // pred_check
      _
    $region35: #{tpu_custom_call.1} parent=1 // pred_check_branch
      %219 = sbr.rel (0) target = $region37
    $region36: #{tpu_custom_call.1} parent=1 // pred_region
      %221 = vsyncadd [#allocation4], 0
      %s223 = sshll.u32 [#allocation9], 4
      %s224 = int_to_ptr.vmem [resolvable:$true] %s223
      %s225 = sshll.u32 %s5, 4
      %s226 = int_to_ptr.hbm [resolvable:$true] %s225
      %228 = dma.vmem_to_hbm [thread:$0]  %s224, 64, %s226, [#allocation4]
    $region37: #{tpu_custom_call.1} parent=1 // pred_fallthru
      _
    // Predicated region
    $region38: #{tpu_custom_call.1} parent=1 // pred_check
      _
    $region39: #{tpu_custom_call.1} parent=1 // pred_check_branch
      %230 = sbr.rel (0) target = $region41
    $region40: #{tpu_custom_call.1} parent=1 // pred_region
      %232 = dma.done [#allocation4], 64
    $region41: #{tpu_custom_call.1} parent=1 // pred_fallthru
      _
    %233 = vsyncpa [#allocation4], 1
    %234 = vsyncpa [#allocation5], 1
    %235 = vsyncpa [#allocation7], 1

</llo_original>
